<compile_context>
chip_gen: v6e
topology: v6e:2x2x1
jax: 0.10.0
libtpu: 0.0.40
codegen_flags: <defaults>
</compile_context>

<pallas_src>
import functools

import numpy as np

import jax
import jax.numpy as jnp
from jax import lax
from jax.experimental import pallas as pl
from jax.experimental.pallas import tpu as pltpu


# ----------------------------------------------------------------------------
# Weight setup (cached per L): L x L minimum-phase (Hilbert) matrix, transposed
# so that phase = log_mag @ Mh^T, reproducing exactly:
#   double_x = [m, flip(m)[1:]]            (length 2L-1, even extension)
#   F = fft(double_x); A = F * w           (w = [1, 2*(L-1 ones), (L-1 zeros)])
#   phase = imag(ifft(A))[:L]
# ----------------------------------------------------------------------------
@functools.lru_cache(maxsize=None)
def _hilbert_matrix_t(L: int):
    M = 2 * L - 1
    rows = np.arange(M)
    cols = np.where(rows < L, rows, 2 * L - 2 - rows)            # even extension
    E = np.zeros((M, L), np.float64)
    E[np.arange(M), cols] = 1.0
    w = np.concatenate([np.ones(1), 2.0 * np.ones(L - 1), np.zeros(L - 1)])
    FE = np.fft.fft(E, axis=0)                                    # (M, L) complex
    Mh = np.imag(np.fft.ifft(FE * w[:, None], axis=0))[:L, :]     # (L, L) real
    return jnp.asarray(Mh.T, dtype=jnp.float32)                   # phase = lm @ Mh.T


def _vmem_capacity_bytes() -> int:
    try:
        return int(pltpu.get_tpu_info().vmem_capacity_bytes)
    except Exception:
        return 64 * 1024 * 1024   # v7x per-TC physical VMEM (most conservative)


# ----------------------------------------------------------------------------
# Kernel: TN batch rows per grid step, native [TN, 8, L] block.
#   x_ref / o_ref : (TN, 8, L)   channel axis == sublane axis
#   mht_ref       : (L, L)       grid-invariant, resident in VMEM
# ----------------------------------------------------------------------------
def _passivity_kernel(x_ref, mht_ref, o_ref):
    f32 = jnp.float32
    # Per-channel (TN, L) slabs (sublane extracts; XLU slot is idle otherwise).
    ar = x_ref[:, 0, :].astype(f32); ai = x_ref[:, 1, :].astype(f32)
    br = x_ref[:, 2, :].astype(f32); bi = x_ref[:, 3, :].astype(f32)
    cr = x_ref[:, 4, :].astype(f32); ci = x_ref[:, 5, :].astype(f32)
    dr = x_ref[:, 6, :].astype(f32); di = x_ref[:, 7, :].astype(f32)

    # sigma_max^2 of the 2x2 complex S-matrix (closed form):
    #   sigma_max^2 = (||S||_F^2 + sqrt(||S||_F^4 - 4 |det S|^2)) / 2
    frob = (ar * ar + ai * ai + br * br + bi * bi
            + cr * cr + ci * ci + dr * dr + di * di)
    det_re = (ar * dr - ai * di) - (br * cr - bi * ci)
    det_im = (ar * di + ai * dr) - (br * ci + bi * cr)
    det2 = det_re * det_re + det_im * det_im
    disc = jnp.maximum(frob * frob - 4.0 * det2, 0.0)
    sig2 = jnp.maximum(0.5 * (frob + jnp.sqrt(disc)), 1.0)        # max(sigma,1)^2

    # filter_mag = 1/(1+relu(sigma-1)) = 1/max(sigma,1) = rsqrt(sig2)
    # log_mag    = log(filter_mag)     = -0.5*log(sig2)        (exact algebra)
    log_mag = -0.5 * jnp.log(sig2)                                # (TN, L)
    filter_mag = lax.rsqrt(sig2)

    # Minimum-phase reconstruction: one (TN, L) @ (L, L) MXU matmul.
    phase = jnp.dot(log_mag, mht_ref[...], preferred_element_type=f32)
    f_re = filter_mag * jnp.cos(phase)
    f_im = filter_mag * jnp.sin(phase)

    dt = o_ref.dtype
    # (even + i*odd) * (f_re + i*f_im), pair by pair.  The inputs are re-read
    # from the VMEM-resident block (not kept live across the matmul).
    for j in range(4):
        er = x_ref[:, 2 * j, :].astype(f32)
        ei = x_ref[:, 2 * j + 1, :].astype(f32)
        o_ref[:, 2 * j, :] = (er * f_re - ei * f_im).astype(dt)
        o_ref[:, 2 * j + 1, :] = (er * f_im + ei * f_re).astype(dt)


def passivity_layer(x, tn_max=256):
    N, C2, L = x.shape
    assert C2 == 8, "specialized to a 2x2 (two-port) S-matrix: C2 == 8"

    mht = _hilbert_matrix_t(L)                    # cached (L, L) f32 weight
    itemsize = jnp.dtype(x.dtype).itemsize

    # --- VMEM-budgeted batch tile -------------------------------------------
    vmem_cap = _vmem_capacity_bytes()
    mht_bytes = L * L * 4
    reserve = 8 << 20                             # compiler internal scratch etc.
    budget = int(vmem_cap * 0.85) - reserve - mht_bytes
    # Per batch row: double-buffered input + output blocks plus ~3 block-rows of
    # live f32 temps inside the kernel.
    per_row = 4 * C2 * L * itemsize + 3 * C2 * L * 4
    tn_cap = max(1, budget // per_row) if budget > per_row else 1
    # TODO(synk): if the resident L x L matrix alone approaches VMEM (large L,
    # first on v7x with 64 MiB/TC), add a K grid axis over the Hilbert matmul
    # with a phase accumulator scratch instead of keeping it whole in VMEM.
    TN = int(min(tn_max, tn_cap, N))
    # Keep >= 2 grid steps when there is enough work so v7x can shard the
    # "parallel" batch axis across both TensorCores.
    if N >= 16 and pl.cdiv(N, TN) < 2:
        TN = int(pl.cdiv(N, 2))
    TN = max(TN, 1)
    grid = (pl.cdiv(N, TN),)

    vmem_limit = int(min(vmem_cap - (2 << 20), vmem_cap * 0.95))

    return pl.pallas_call(
        _passivity_kernel,
        out_shape=jax.ShapeDtypeStruct((N, C2, L), x.dtype),
        grid_spec=pltpu.PrefetchScalarGridSpec(
            num_scalar_prefetch=0,
            grid=grid,
            in_specs=[
                pl.BlockSpec((TN, C2, L), lambda n: (n, 0, 0)),
                # Grid-invariant Hilbert matrix: whole array resident in VMEM
                # (no per-step re-fetch, no double buffering).
                pl.BlockSpec(memory_space=pltpu.MemorySpace.VMEM),
            ],
            out_specs=pl.BlockSpec((TN, C2, L), lambda n: (n, 0, 0)),
        ),
        compiler_params=pltpu.CompilerParams(
            dimension_semantics=("parallel",),
            vmem_limit_bytes=vmem_limit,
        ),
    )(x, mht)


# ----------------------------------------------------------------------------
# Independent numpy reference mirroring the torch forward (per batch element).
# ----------------------------------------------------------------------------
def _reference(x):
    x = np.asarray(x)
    N, C2, L = x.shape
    w = np.concatenate([np.ones(1), 2.0 * np.ones(L - 1), np.zeros(L - 1)])
    out = np.zeros_like(x)
    for n in range(N):
        xb = x[n].astype(np.float64)
        ar, ai, br, bi, cr, ci, dr, di = (xb[k] for k in range(8))
        frob = (ar * ar + ai * ai + br * br + bi * bi
                + cr * cr + ci * ci + dr * dr + di * di)
        det_re = (ar * dr - ai * di) - (br * cr - bi * ci)
        det_im = (ar * di + ai * dr) - (br * ci + bi * cr)
        disc = np.maximum(frob * frob - 4.0 * (det_re ** 2 + det_im ** 2), 0.0)
        sing = np.sqrt(0.5 * (frob + np.sqrt(disc)))
        filter_mag = 1.0 / (1.0 + np.maximum(sing - 1.0, 0.0))
        log_mag = np.log(filter_mag)
        double_x = np.concatenate([log_mag, log_mag[::-1][1:]])
        F = np.fft.fft(double_x)
        phase = np.imag(np.fft.ifft(F * w))[:L]
        filt = filter_mag * np.exp(1j * phase)
        cplx = (xb[0::2, :] + 1j * xb[1::2, :]) * filt[None, :]
        out[n, 0::2, :] = np.real(cplx).astype(x.dtype)
        out[n, 1::2, :] = np.imag(cplx).astype(x.dtype)
    return out


if __name__ == "__main__":
    N, C2, L = 2, 8, 16
    key = jax.random.PRNGKey(0)
    x = jax.random.normal(key, (N, C2, L), dtype=jnp.float32) * 0.8

    out = jax.block_until_ready(passivity_layer(x))

    ref = _reference(x)
    assert out.shape == (N, C2, L) and out.dtype == x.dtype
    out_np = np.asarray(out)
    max_err = float(np.max(np.abs(out_np - ref)))
    assert np.allclose(out_np, ref, rtol=2e-3, atol=2e-3), f"max abs err = {max_err}"

    print("KERNEL_OK")
</pallas_src>

<mosaic_0001>
module attributes {stable_mosaic.version = 11 : i64} {
  func.func @_passivity_kernel(%arg0: i32, %arg1: memref<2x8x16xf32, #tpu.memory_space<vmem>>, %arg2: memref<16x16xf32, #tpu.memory_space<vmem>>, %arg3: memref<2x8x16xf32, #tpu.memory_space<vmem>>) attributes {dimension_semantics = [#tpu.dimension_semantics<parallel>], iteration_bounds = array<i64: 1>, scalar_prefetch = 0 : i64, scratch_operands = 0 : i64, tpu.core_type = #tpu.core_type<tc>, window_params = [{transform_indices = @transform_0, window_bounds = array<i64: 2, 8, 16>}, {pipeline_mode = #tpu.pipeline_mode<synchronous>, transform_indices = @transform_1, window_bounds = array<i64: 16, 16>}, {transform_indices = @transform_2, window_bounds = array<i64: 2, 8, 16>}]} {
    %c0 = arith.constant 0 : index
    %c0_0 = arith.constant 0 : index
    %c0_1 = arith.constant 0 : index
    %0 = vector.load %arg1[%c0, %c0_0, %c0_1] : memref<2x8x16xf32, #tpu.memory_space<vmem>>, vector<2x1x16xf32>
    %1 = vector.shape_cast %0 : vector<2x1x16xf32> to vector<2x16xf32>
    %c0_2 = arith.constant 0 : index
    %c1 = arith.constant 1 : index
    %c0_3 = arith.constant 0 : index
    %2 = vector.load %arg1[%c0_2, %c1, %c0_3] : memref<2x8x16xf32, #tpu.memory_space<vmem>>, vector<2x1x16xf32>
    %3 = vector.shape_cast %2 : vector<2x1x16xf32> to vector<2x16xf32>
    %c0_4 = arith.constant 0 : index
    %c2 = arith.constant 2 : index
    %c0_5 = arith.constant 0 : index
    %4 = vector.load %arg1[%c0_4, %c2, %c0_5] : memref<2x8x16xf32, #tpu.memory_space<vmem>>, vector<2x1x16xf32>
    %5 = vector.shape_cast %4 : vector<2x1x16xf32> to vector<2x16xf32>
    %c0_6 = arith.constant 0 : index
    %c3 = arith.constant 3 : index
    %c0_7 = arith.constant 0 : index
    %6 = vector.load %arg1[%c0_6, %c3, %c0_7] : memref<2x8x16xf32, #tpu.memory_space<vmem>>, vector<2x1x16xf32>
    %7 = vector.shape_cast %6 : vector<2x1x16xf32> to vector<2x16xf32>
    %c0_8 = arith.constant 0 : index
    %c4 = arith.constant 4 : index
    %c0_9 = arith.constant 0 : index
    %8 = vector.load %arg1[%c0_8, %c4, %c0_9] : memref<2x8x16xf32, #tpu.memory_space<vmem>>, vector<2x1x16xf32>
    %9 = vector.shape_cast %8 : vector<2x1x16xf32> to vector<2x16xf32>
    %c0_10 = arith.constant 0 : index
    %c5 = arith.constant 5 : index
    %c0_11 = arith.constant 0 : index
    %10 = vector.load %arg1[%c0_10, %c5, %c0_11] : memref<2x8x16xf32, #tpu.memory_space<vmem>>, vector<2x1x16xf32>
    %11 = vector.shape_cast %10 : vector<2x1x16xf32> to vector<2x16xf32>
    %c0_12 = arith.constant 0 : index
    %c6 = arith.constant 6 : index
    %c0_13 = arith.constant 0 : index
    %12 = vector.load %arg1[%c0_12, %c6, %c0_13] : memref<2x8x16xf32, #tpu.memory_space<vmem>>, vector<2x1x16xf32>
    %13 = vector.shape_cast %12 : vector<2x1x16xf32> to vector<2x16xf32>
    %c0_14 = arith.constant 0 : index
    %c7 = arith.constant 7 : index
    %c0_15 = arith.constant 0 : index
    %14 = vector.load %arg1[%c0_14, %c7, %c0_15] : memref<2x8x16xf32, #tpu.memory_space<vmem>>, vector<2x1x16xf32>
    %15 = vector.shape_cast %14 : vector<2x1x16xf32> to vector<2x16xf32>
    %16 = arith.mulf %1, %1 : vector<2x16xf32>
    %17 = arith.mulf %3, %3 : vector<2x16xf32>
    %18 = arith.addf %16, %17 : vector<2x16xf32>
    %19 = arith.mulf %5, %5 : vector<2x16xf32>
    %20 = arith.addf %18, %19 : vector<2x16xf32>
    %21 = arith.mulf %7, %7 : vector<2x16xf32>
    %22 = arith.addf %20, %21 : vector<2x16xf32>
    %23 = arith.mulf %9, %9 : vector<2x16xf32>
    %24 = arith.addf %22, %23 : vector<2x16xf32>
    %25 = arith.mulf %11, %11 : vector<2x16xf32>
    %26 = arith.addf %24, %25 : vector<2x16xf32>
    %27 = arith.mulf %13, %13 : vector<2x16xf32>
    %28 = arith.addf %26, %27 : vector<2x16xf32>
    %29 = arith.mulf %15, %15 : vector<2x16xf32>
    %30 = arith.addf %28, %29 : vector<2x16xf32>
    %31 = arith.mulf %1, %13 : vector<2x16xf32>
    %32 = arith.mulf %3, %15 : vector<2x16xf32>
    %33 = arith.subf %31, %32 : vector<2x16xf32>
    %34 = arith.mulf %5, %9 : vector<2x16xf32>
    %35 = arith.mulf %7, %11 : vector<2x16xf32>
    %36 = arith.subf %34, %35 : vector<2x16xf32>
    %37 = arith.subf %33, %36 : vector<2x16xf32>
    %38 = arith.mulf %1, %15 : vector<2x16xf32>
    %39 = arith.mulf %3, %13 : vector<2x16xf32>
    %40 = arith.addf %38, %39 : vector<2x16xf32>
    %41 = arith.mulf %5, %11 : vector<2x16xf32>
    %42 = arith.mulf %7, %9 : vector<2x16xf32>
    %43 = arith.addf %41, %42 : vector<2x16xf32>
    %44 = arith.subf %40, %43 : vector<2x16xf32>
    %45 = arith.mulf %37, %37 : vector<2x16xf32>
    %46 = arith.mulf %44, %44 : vector<2x16xf32>
    %47 = arith.addf %45, %46 : vector<2x16xf32>
    %48 = arith.mulf %30, %30 : vector<2x16xf32>
    %cst = arith.constant 4.000000e+00 : f32
    %49 = vector.broadcast %cst : f32 to vector<2x16xf32>
    %50 = arith.mulf %49, %47 : vector<2x16xf32>
    %51 = arith.subf %48, %50 : vector<2x16xf32>
    %cst_16 = arith.constant 0.000000e+00 : f32
    %52 = vector.broadcast %cst_16 : f32 to vector<2x16xf32>
    %53 = arith.maximumf %51, %52 : vector<2x16xf32>
    %54 = math.sqrt %53 : vector<2x16xf32>
    %55 = arith.addf %30, %54 : vector<2x16xf32>
    %cst_17 = arith.constant 5.000000e-01 : f32
    %56 = vector.broadcast %cst_17 : f32 to vector<2x16xf32>
    %57 = arith.mulf %56, %55 : vector<2x16xf32>
    %cst_18 = arith.constant 1.000000e+00 : f32
    %58 = vector.broadcast %cst_18 : f32 to vector<2x16xf32>
    %59 = arith.maximumf %57, %58 : vector<2x16xf32>
    %60 = math.log %59 : vector<2x16xf32>
    %cst_19 = arith.constant -5.000000e-01 : f32
    %61 = vector.broadcast %cst_19 : f32 to vector<2x16xf32>
    %62 = arith.mulf %61, %60 : vector<2x16xf32>
    %63 = math.rsqrt %59 : vector<2x16xf32>
    %c0_20 = arith.constant 0 : index
    %c0_21 = arith.constant 0 : index
    %64 = vector.load %arg2[%c0_20, %c0_21] : memref<16x16xf32, #tpu.memory_space<vmem>>, vector<16x16xf32>
    %cst_22 = arith.constant dense<0.000000e+00> : vector<2x16xf32>
    %65 = tpu.matmul %62, %64, %cst_22 {dimension_numbers = #tpu.dot_dimension_numbers<[1], [0], [0], [1], [0, 0, 1, 1], [], []>} : vector<2x16xf32>, vector<16x16xf32>, vector<2x16xf32> -> vector<2x16xf32>
    %66 = math.cos %65 : vector<2x16xf32>
    %67 = arith.mulf %63, %66 : vector<2x16xf32>
    %68 = math.sin %65 : vector<2x16xf32>
    %69 = arith.mulf %63, %68 : vector<2x16xf32>
    %c0_23 = arith.constant 0 : index
    %c0_24 = arith.constant 0 : index
    %c0_25 = arith.constant 0 : index
    %70 = vector.load %arg1[%c0_23, %c0_24, %c0_25] : memref<2x8x16xf32, #tpu.memory_space<vmem>>, vector<2x1x16xf32>
    %71 = vector.shape_cast %70 : vector<2x1x16xf32> to vector<2x16xf32>
    %c0_26 = arith.constant 0 : index
    %c1_27 = arith.constant 1 : index
    %c0_28 = arith.constant 0 : index
    %72 = vector.load %arg1[%c0_26, %c1_27, %c0_28] : memref<2x8x16xf32, #tpu.memory_space<vmem>>, vector<2x1x16xf32>
    %73 = vector.shape_cast %72 : vector<2x1x16xf32> to vector<2x16xf32>
    %74 = arith.mulf %71, %67 : vector<2x16xf32>
    %75 = arith.mulf %73, %69 : vector<2x16xf32>
    %76 = arith.subf %74, %75 : vector<2x16xf32>
    %c0_29 = arith.constant 0 : index
    %c0_30 = arith.constant 0 : index
    %c0_31 = arith.constant 0 : index
    %77 = vector.load %arg3[%c0_29, %c0_30, %c0_31] : memref<2x8x16xf32, #tpu.memory_space<vmem>>, vector<2x1x16xf32>
    %78 = vector.shape_cast %77 : vector<2x1x16xf32> to vector<2x16xf32>
    %79 = vector.shape_cast %76 : vector<2x16xf32> to vector<2x1x16xf32>
    tpu.vector_store %arg3[%c0_29, %c0_30, %c0_31], %79 {strides = array<i32>} : memref<2x8x16xf32, #tpu.memory_space<vmem>>, vector<2x1x16xf32>,
    %80 = arith.mulf %71, %69 : vector<2x16xf32>
    %81 = arith.mulf %73, %67 : vector<2x16xf32>
    %82 = arith.addf %80, %81 : vector<2x16xf32>
    %c0_32 = arith.constant 0 : index
    %c1_33 = arith.constant 1 : index
    %c0_34 = arith.constant 0 : index
    %83 = vector.load %arg3[%c0_32, %c1_33, %c0_34] : memref<2x8x16xf32, #tpu.memory_space<vmem>>, vector<2x1x16xf32>
    %84 = vector.shape_cast %83 : vector<2x1x16xf32> to vector<2x16xf32>
    %85 = vector.shape_cast %82 : vector<2x16xf32> to vector<2x1x16xf32>
    tpu.vector_store %arg3[%c0_32, %c1_33, %c0_34], %85 {strides = array<i32>} : memref<2x8x16xf32, #tpu.memory_space<vmem>>, vector<2x1x16xf32>,
    %c0_35 = arith.constant 0 : index
    %c2_36 = arith.constant 2 : index
    %c0_37 = arith.constant 0 : index
    %86 = vector.load %arg1[%c0_35, %c2_36, %c0_37] : memref<2x8x16xf32, #tpu.memory_space<vmem>>, vector<2x1x16xf32>
    %87 = vector.shape_cast %86 : vector<2x1x16xf32> to vector<2x16xf32>
    %c0_38 = arith.constant 0 : index
    %c3_39 = arith.constant 3 : index
    %c0_40 = arith.constant 0 : index
    %88 = vector.load %arg1[%c0_38, %c3_39, %c0_40] : memref<2x8x16xf32, #tpu.memory_space<vmem>>, vector<2x1x16xf32>
    %89 = vector.shape_cast %88 : vector<2x1x16xf32> to vector<2x16xf32>
    %90 = arith.mulf %87, %67 : vector<2x16xf32>
    %91 = arith.mulf %89, %69 : vector<2x16xf32>
    %92 = arith.subf %90, %91 : vector<2x16xf32>
    %c0_41 = arith.constant 0 : index
    %c2_42 = arith.constant 2 : index
    %c0_43 = arith.constant 0 : index
    %93 = vector.load %arg3[%c0_41, %c2_42, %c0_43] : memref<2x8x16xf32, #tpu.memory_space<vmem>>, vector<2x1x16xf32>
    %94 = vector.shape_cast %93 : vector<2x1x16xf32> to vector<2x16xf32>
    %95 = vector.shape_cast %92 : vector<2x16xf32> to vector<2x1x16xf32>
    tpu.vector_store %arg3[%c0_41, %c2_42, %c0_43], %95 {strides = array<i32>} : memref<2x8x16xf32, #tpu.memory_space<vmem>>, vector<2x1x16xf32>,
    %96 = arith.mulf %87, %69 : vector<2x16xf32>
    %97 = arith.mulf %89, %67 : vector<2x16xf32>
    %98 = arith.addf %96, %97 : vector<2x16xf32>
    %c0_44 = arith.constant 0 : index
    %c3_45 = arith.constant 3 : index
    %c0_46 = arith.constant 0 : index
    %99 = vector.load %arg3[%c0_44, %c3_45, %c0_46] : memref<2x8x16xf32, #tpu.memory_space<vmem>>, vector<2x1x16xf32>
    %100 = vector.shape_cast %99 : vector<2x1x16xf32> to vector<2x16xf32>
    %101 = vector.shape_cast %98 : vector<2x16xf32> to vector<2x1x16xf32>
    tpu.vector_store %arg3[%c0_44, %c3_45, %c0_46], %101 {strides = array<i32>} : memref<2x8x16xf32, #tpu.memory_space<vmem>>, vector<2x1x16xf32>,
    %c0_47 = arith.constant 0 : index
    %c4_48 = arith.constant 4 : index
    %c0_49 = arith.constant 0 : index
    %102 = vector.load %arg1[%c0_47, %c4_48, %c0_49] : memref<2x8x16xf32, #tpu.memory_space<vmem>>, vector<2x1x16xf32>
    %103 = vector.shape_cast %102 : vector<2x1x16xf32> to vector<2x16xf32>
    %c0_50 = arith.constant 0 : index
    %c5_51 = arith.constant 5 : index
    %c0_52 = arith.constant 0 : index
    %104 = vector.load %arg1[%c0_50, %c5_51, %c0_52] : memref<2x8x16xf32, #tpu.memory_space<vmem>>, vector<2x1x16xf32>
    %105 = vector.shape_cast %104 : vector<2x1x16xf32> to vector<2x16xf32>
    %106 = arith.mulf %103, %67 : vector<2x16xf32>
    %107 = arith.mulf %105, %69 : vector<2x16xf32>
    %108 = arith.subf %106, %107 : vector<2x16xf32>
    %c0_53 = arith.constant 0 : index
    %c4_54 = arith.constant 4 : index
    %c0_55 = arith.constant 0 : index
    %109 = vector.load %arg3[%c0_53, %c4_54, %c0_55] : memref<2x8x16xf32, #tpu.memory_space<vmem>>, vector<2x1x16xf32>
    %110 = vector.shape_cast %109 : vector<2x1x16xf32> to vector<2x16xf32>
    %111 = vector.shape_cast %108 : vector<2x16xf32> to vector<2x1x16xf32>
    tpu.vector_store %arg3[%c0_53, %c4_54, %c0_55], %111 {strides = array<i32>} : memref<2x8x16xf32, #tpu.memory_space<vmem>>, vector<2x1x16xf32>,
    %112 = arith.mulf %103, %69 : vector<2x16xf32>
    %113 = arith.mulf %105, %67 : vector<2x16xf32>
    %114 = arith.addf %112, %113 : vector<2x16xf32>
    %c0_56 = arith.constant 0 : index
    %c5_57 = arith.constant 5 : index
    %c0_58 = arith.constant 0 : index
    %115 = vector.load %arg3[%c0_56, %c5_57, %c0_58] : memref<2x8x16xf32, #tpu.memory_space<vmem>>, vector<2x1x16xf32>
    %116 = vector.shape_cast %115 : vector<2x1x16xf32> to vector<2x16xf32>
    %117 = vector.shape_cast %114 : vector<2x16xf32> to vector<2x1x16xf32>
    tpu.vector_store %arg3[%c0_56, %c5_57, %c0_58], %117 {strides = array<i32>} : memref<2x8x16xf32, #tpu.memory_space<vmem>>, vector<2x1x16xf32>,
    %c0_59 = arith.constant 0 : index
    %c6_60 = arith.constant 6 : index
    %c0_61 = arith.constant 0 : index
    %118 = vector.load %arg1[%c0_59, %c6_60, %c0_61] : memref<2x8x16xf32, #tpu.memory_space<vmem>>, vector<2x1x16xf32>
    %119 = vector.shape_cast %118 : vector<2x1x16xf32> to vector<2x16xf32>
    %c0_62 = arith.constant 0 : index
    %c7_63 = arith.constant 7 : index
    %c0_64 = arith.constant 0 : index
    %120 = vector.load %arg1[%c0_62, %c7_63, %c0_64] : memref<2x8x16xf32, #tpu.memory_space<vmem>>, vector<2x1x16xf32>
    %121 = vector.shape_cast %120 : vector<2x1x16xf32> to vector<2x16xf32>
    %122 = arith.mulf %119, %67 : vector<2x16xf32>
    %123 = arith.mulf %121, %69 : vector<2x16xf32>
    %124 = arith.subf %122, %123 : vector<2x16xf32>
    %c0_65 = arith.constant 0 : index
    %c6_66 = arith.constant 6 : index
    %c0_67 = arith.constant 0 : index
    %125 = vector.load %arg3[%c0_65, %c6_66, %c0_67] : memref<2x8x16xf32, #tpu.memory_space<vmem>>, vector<2x1x16xf32>
    %126 = vector.shape_cast %125 : vector<2x1x16xf32> to vector<2x16xf32>
    %127 = vector.shape_cast %124 : vector<2x16xf32> to vector<2x1x16xf32>
    tpu.vector_store %arg3[%c0_65, %c6_66, %c0_67], %127 {strides = array<i32>} : memref<2x8x16xf32, #tpu.memory_space<vmem>>, vector<2x1x16xf32>,
    %128 = arith.mulf %119, %69 : vector<2x16xf32>
    %129 = arith.mulf %121, %67 : vector<2x16xf32>
    %130 = arith.addf %128, %129 : vector<2x16xf32>
    %c0_68 = arith.constant 0 : index
    %c7_69 = arith.constant 7 : index
    %c0_70 = arith.constant 0 : index
    %131 = vector.load %arg3[%c0_68, %c7_69, %c0_70] : memref<2x8x16xf32, #tpu.memory_space<vmem>>, vector<2x1x16xf32>
    %132 = vector.shape_cast %131 : vector<2x1x16xf32> to vector<2x16xf32>
    %133 = vector.shape_cast %130 : vector<2x16xf32> to vector<2x1x16xf32>
    tpu.vector_store %arg3[%c0_68, %c7_69, %c0_70], %133 {strides = array<i32>} : memref<2x8x16xf32, #tpu.memory_space<vmem>>, vector<2x1x16xf32>,
    return
  }
  func.func @transform_0(%arg0: i32) -> (i32, i32, i32) {
    %c0_i32 = arith.constant 0 : i32
    %c0_i32_0 = arith.constant 0 : i32
    %c0_i32_1 = arith.constant 0 : i32
    return %arg0, %c0_i32, %c0_i32_0 : i32, i32, i32
  }
  func.func @transform_1(%arg0: i32) -> (i32, i32) {
    %c0_i32 = arith.constant 0 : i32
    %c0_i32_0 = arith.constant 0 : i32
    %c0_i32_1 = arith.constant 0 : i32
    return %c0_i32, %c0_i32_0 : i32, i32
  }
  func.func @transform_2(%arg0: i32) -> (i32, i32, i32) {
    %c0_i32 = arith.constant 0 : i32
    %c0_i32_0 = arith.constant 0 : i32
    %c0_i32_1 = arith.constant 0 : i32
    return %arg0, %c0_i32, %c0_i32_0 : i32, i32, i32
  }
}

</mosaic_0001>

<llo_original>
// kernel: tpu_custom_call.1
$region0: #{tpu_custom_call.1}
  #allocation0 [shape = 'u32[]', space=smem, size = 0x4, offset = 0x4, fixed_abs, tag = 'smem constant byte address 0x4 - core index']
  #allocation1 [shape = 'u32[144,128]{1,0:T(1,128)}', space=vmem, size = 0x12000, scoped, tag = 'internal scratch']
  %s0 = inlined_call_operand.hbm [shape: f32[2,8,16], index: 0, kind: input, shape index: {}]
  %s1 = inlined_call_operand.hbm [shape: f32[16,16], index: 1, kind: input, shape index: {}]
  %s2 = inlined_call_operand.hbm [shape: f32[2,8,16], index: 2, kind: output, shape index: {}]
  %s3 = sld [smem:[#allocation0]]
  $region26: #{tpu_custom_call.1} parent=0
    _
  %s5 = ssub.s32 1, %s3
  %s6 = scalar_select 0, %s5, %s3
  $region1: #{tpu_custom_call.1} parent=0
    #allocation2 [shape = 'u8[8192]{0}', space=vmem, size = 0x2000, scoped, tag = 'input window, operand 0, single buffered']
    #allocation3 [shape = 's32[1]{0}', space=sflag, size = 0x4, scoped, tag = 'scoped memory for tpu_custom_call.1']
    #allocation4 [shape = 's32[1]{0}', space=sflag, size = 0x4, scoped, tag = 'scoped memory for tpu_custom_call.1']
    #allocation5 [shape = 'u8[8192]{0}', space=vmem, size = 0x2000, scoped, tag = 'input window, operand 1, single buffered']
    #allocation6 [shape = 's32[1]{0}', space=sflag, size = 0x4, scoped, tag = 'scoped memory for tpu_custom_call.1']
    #allocation7 [shape = 'u8[8192]{0}', space=vmem, size = 0x2000, scoped, tag = 'output window, operand 0, single buffered']
    %7 = vsyncpa [#allocation3], 0
    %8 = vsyncpa [#allocation6], 0
    %9 = vsyncpa [#allocation4], 0
    // Predicated region
    $region2: #{tpu_custom_call.1} parent=1 // pred_check
      _
    $region3: #{tpu_custom_call.1} parent=1 // pred_check_branch
      %11 = sbr.rel (0) target = $region5
    $region4: #{tpu_custom_call.1} parent=1 // pred_region
      %s13 = ssub.s32 256, 256
      %14 = vsyncadd [#allocation3], %s13
      %s15 = sshll.u32 [#allocation2], 4
      %s16 = int_to_ptr.vmem [resolvable:$true] %s15
      %21 = dma.hbm_to_vmem [thread:$0]  %s0, 256, %s16, [#allocation3], 128, 128, 8
    $region5: #{tpu_custom_call.1} parent=1 // pred_fallthru
      _
    // Predicated region
    $region6: #{tpu_custom_call.1} parent=1 // pred_check
      _
    $region7: #{tpu_custom_call.1} parent=1 // pred_check_branch
      %23 = sbr.rel (0) target = $region9
    $region8: #{tpu_custom_call.1} parent=1 // pred_region
      %s25 = ssub.s32 256, 256
      %26 = vsyncadd [#allocation6], %s25
      %s27 = sshll.u32 [#allocation5], 4
      %s28 = int_to_ptr.vmem [resolvable:$true] %s27
      %33 = dma.hbm_to_vmem [thread:$0]  %s1, 256, %s28, [#allocation6], 128, 128, 8
    $region9: #{tpu_custom_call.1} parent=1 // pred_fallthru
      _
    // Predicated region
    $region10: #{tpu_custom_call.1} parent=1 // pred_check
      _
    $region11: #{tpu_custom_call.1} parent=1 // pred_check_branch
      %35 = sbr.rel (0) target = $region13
    $region12: #{tpu_custom_call.1} parent=1 // pred_region
      %36 = dma.done [#allocation3], 256
    $region13: #{tpu_custom_call.1} parent=1 // pred_fallthru
      _
    // Predicated region
    $region14: #{tpu_custom_call.1} parent=1 // pred_check
      _
    $region15: #{tpu_custom_call.1} parent=1 // pred_check_branch
      %38 = sbr.rel (0) target = $region17
    $region16: #{tpu_custom_call.1} parent=1 // pred_region
      %39 = dma.done [#allocation6], 256
    $region17: #{tpu_custom_call.1} parent=1 // pred_fallthru
      _
    %v40 = vld [vmem:[#allocation2] sm:$0x1]
    %v41 = vld [vmem:[#allocation2 + $0x8] sm:$0x1]
    %v42 = vld [vmem:[#allocation2 + $0x1] sm:$0x1]
    %v43 = vld [vmem:[#allocation2 + $0x9] sm:$0x1]
    %v44 = vld [vmem:[#allocation2 + $0x2] sm:$0x1]
    %v45 = vld [vmem:[#allocation2 + $0xa] sm:$0x1]
    %v46 = vld [vmem:[#allocation2 + $0x3] sm:$0x1]
    %v47 = vld [vmem:[#allocation2 + $0xb] sm:$0x1]
    %v48 = vld [vmem:[#allocation2 + $0x4] sm:$0x1]
    %v49 = vld [vmem:[#allocation2 + $0xc] sm:$0x1]
    %v50 = vld [vmem:[#allocation2 + $0x5] sm:$0x1]
    %v51 = vld [vmem:[#allocation2 + $0xd] sm:$0x1]
    %v52 = vld [vmem:[#allocation2 + $0x6] sm:$0x1]
    %v53 = vld [vmem:[#allocation2 + $0xe] sm:$0x1]
    %v54 = vld [vmem:[#allocation2 + $0x7] sm:$0x1]
    %v55 = vld [vmem:[#allocation2 + $0xf] sm:$0x1]
    %v56 = vmul.f32 %v40, %v40
    %v57 = vmul.f32 %v41, %v41
    %v58 = vmul.f32 %v42, %v42
    %v59 = vmul.f32 %v43, %v43
    %v60 = vadd.f32 %v56, %v58
    %v61 = vadd.f32 %v57, %v59
    %v62 = vmul.f32 %v44, %v44
    %v63 = vmul.f32 %v45, %v45
    %v64 = vadd.f32 %v60, %v62
    %v65 = vadd.f32 %v61, %v63
    %v66 = vmul.f32 %v46, %v46
    %v67 = vmul.f32 %v47, %v47
    %v68 = vadd.f32 %v64, %v66
    %v69 = vadd.f32 %v65, %v67
    %v70 = vmul.f32 %v48, %v48
    %v71 = vmul.f32 %v49, %v49
    %v72 = vadd.f32 %v68, %v70
    %v73 = vadd.f32 %v69, %v71
    %v74 = vmul.f32 %v50, %v50
    %v75 = vmul.f32 %v51, %v51
    %v76 = vadd.f32 %v72, %v74
    %v77 = vadd.f32 %v73, %v75
    %v78 = vmul.f32 %v52, %v52
    %v79 = vmul.f32 %v53, %v53
    %v80 = vadd.f32 %v76, %v78
    %v81 = vadd.f32 %v77, %v79
    %v82 = vmul.f32 %v54, %v54
    %v83 = vmul.f32 %v55, %v55
    %v84 = vadd.f32 %v80, %v82
    %v85 = vadd.f32 %v81, %v83
    %v86 = vmul.f32 %v40, %v52
    %v87 = vmul.f32 %v41, %v53
    %v88 = vmul.f32 %v42, %v54
    %v89 = vmul.f32 %v43, %v55
    %v90 = vsub.f32 %v86, %v88
    %v91 = vsub.f32 %v87, %v89
    %v92 = vmul.f32 %v44, %v48
    %v93 = vmul.f32 %v45, %v49
    %v94 = vmul.f32 %v46, %v50
    %v95 = vmul.f32 %v47, %v51
    %v96 = vsub.f32 %v92, %v94
    %v97 = vsub.f32 %v93, %v95
    %v98 = vsub.f32 %v90, %v96
    %v99 = vsub.f32 %v91, %v97
    %v100 = vmul.f32 %v40, %v54
    %v101 = vmul.f32 %v41, %v55
    %v102 = vmul.f32 %v42, %v52
    %v103 = vmul.f32 %v43, %v53
    %v104 = vadd.f32 %v100, %v102
    %v105 = vadd.f32 %v101, %v103
    %v106 = vmul.f32 %v44, %v50
    %v107 = vmul.f32 %v45, %v51
    %v108 = vmul.f32 %v46, %v48
    %v109 = vmul.f32 %v47, %v49
    %v110 = vadd.f32 %v106, %v108
    %v111 = vadd.f32 %v107, %v109
    %v112 = vsub.f32 %v104, %v110
    %v113 = vsub.f32 %v105, %v111
    %v114 = vmul.f32 %v98, %v98
    %v115 = vmul.f32 %v99, %v99
    %v116 = vmul.f32 %v112, %v112
    %v117 = vmul.f32 %v113, %v113
    %v118 = vadd.f32 %v114, %v116
    %v119 = vadd.f32 %v115, %v117
    %v120 = vmul.f32 %v84, %v84
    %v121 = vmul.f32 %v85, %v85
    %v122 = vmul.f32 %v118, 4.0
    %v123 = vmul.f32 %v119, 4.0
    %v124 = vsub.f32 %v120, %v122
    %v125 = vsub.f32 %v121, %v123
    %v126 = vmax.f32 %v124, 0.0
    %v127 = vmax.f32 %v125, 0.0
    %v128 = vrsqrt.pop %v126
    %v129 = vmul.f32 %v126, %v128
    %vm130 = vcmp.eq.f32.partialorder %v126, inf
    %v131 = vsel %vm130, %v126, %v129
    %vm132 = vcmp.eq.f32.partialorder %v126, 0.0
    %v133 = vand.u32 %v126, 2147483648
    %v134 = vsel %vm132, %v133, %v131
    %v135 = vrsqrt.pop %v127
    %v136 = vmul.f32 %v127, %v135
    %vm137 = vcmp.eq.f32.partialorder %v127, inf
    %v138 = vsel %vm137, %v127, %v136
    %vm139 = vcmp.eq.f32.partialorder %v127, 0.0
    %v140 = vand.u32 %v127, 2147483648
    %v141 = vsel %vm139, %v140, %v138
    %v142 = vadd.f32 %v84, %v134
    %v143 = vadd.f32 %v85, %v141
    %v144 = vmul.f32 %v142, 0.5
    %v145 = vmul.f32 %v143, 0.5
    %v146 = vmax.f32 %v144, 1.0
    %v147 = vmax.f32 %v145, 1.0
    %v148 = vlog2.pop %v146
    %v149 = vmul.f32 %v148, 0.6931472
    %v150 = vlog2.pop %v147
    %v151 = vmul.f32 %v150, 0.6931472
    %v152 = vmul.f32 %v149, -0.5
    %v153 = vmul.f32 %v151, -0.5
    %v154 = vrsqrt.pop %v146
    %v155 = vrsqrt.pop %v147
    %v156 = vld [vmem:[#allocation5] sm:$0xff]
    %v157 = vld [vmem:[#allocation5 + $0x8] sm:$0xff]
    %v160 = vrot.slane %v153, 7
    %vm161 = vcmask 1041409
    %v162 = vsel %vm161, %v160, %v152
    %vm163 = vcmask 130048
    %v164 = vsel %vm163, %v162, 0
    %166 = vmatprep.subr.mxu0 0.0
    %167 = vmatpush1.msra.mxu0 0.0
    %168 = vmatprep.subr.mxu0 0.0
    %169 = vmatpush1.msra.mxu0 0.0
    %170 = vmatprep.subr.mxu0 0.0
    %171 = vmatpush1.msra.mxu0 0.0
    %172 = vmatprep.subr.mxu0 0.0
    %173 = vmatpush1.msra.mxu0 0.0
    %174 = vmatprep.subr.mxu0 0.0
    %175 = vmatpush1.msra.mxu0 0.0
    %176 = vmatprep.subr.mxu0 0.0
    %177 = vmatpush1.msra.mxu0 0.0
    %178 = vmatprep.subr.mxu0 0.0
    %179 = vmatpush1.msra.mxu0 0.0
    %180 = vmatprep.subr.mxu0 0.0
    %181 = vmatpush1.msra.mxu0 0.0
    %182 = vmatprep.subr.mxu0 0.0
    %183 = vmatpush1.msra.mxu0 0.0
    %184 = vmatprep.subr.mxu0 0.0
    %185 = vmatpush1.msra.mxu0 0.0
    %186 = vmatprep.subr.mxu0 0.0
    %187 = vmatpush1.msra.mxu0 0.0
    %188 = vmatprep.subr.mxu0 0.0
    %189 = vmatpush1.msra.mxu0 0.0
    %190 = vmatprep.subr.mxu0 0.0
    %191 = vmatpush1.msra.mxu0 0.0
    %192 = vmatprep.subr.mxu0 0.0
    %193 = vmatpush1.msra.mxu0 0.0
    %194 = vmatprep.subr.mxu0 0.0
    %195 = vmatpush1.msra.mxu0 %v157
    %196 = vmatprep.subr.mxu0 0.0
    %197 = vmatpush1.msra.mxu0 %v156
    %198 = vmatprep.subr.mxu0 0.0
    %199 = vmatpush2.msra.mxu0 0.0
    %200 = vmatprep.subr.mxu0 0.0
    %201 = vmatpush2.msra.mxu0 0.0
    %202 = vmatprep.subr.mxu0 0.0
    %203 = vmatpush2.msra.mxu0 0.0
    %204 = vmatprep.subr.mxu0 0.0
    %205 = vmatpush2.msra.mxu0 0.0
    %206 = vmatprep.subr.mxu0 0.0
    %207 = vmatpush2.msra.mxu0 0.0
    %208 = vmatprep.subr.mxu0 0.0
    %209 = vmatpush2.msra.mxu0 0.0
    %210 = vmatprep.subr.mxu0 0.0
    %211 = vmatpush2.msra.mxu0 0.0
    %212 = vmatprep.subr.mxu0 0.0
    %213 = vmatpush2.msra.mxu0 0.0
    %214 = vmatprep.subr.mxu0 0.0
    %215 = vmatpush2.msra.mxu0 0.0
    %216 = vmatprep.subr.mxu0 0.0
    %217 = vmatpush2.msra.mxu0 0.0
    %218 = vmatprep.subr.mxu0 0.0
    %219 = vmatpush2.msra.mxu0 0.0
    %220 = vmatprep.subr.mxu0 0.0
    %221 = vmatpush2.msra.mxu0 0.0
    %222 = vmatprep.subr.mxu0 0.0
    %223 = vmatpush2.msra.mxu0 0.0
    %224 = vmatprep.subr.mxu0 0.0
    %225 = vmatpush2.msra.mxu0 0.0
    %226 = vmatprep.subr.mxu0 0.0
    %227 = vmatpush2.msra.mxu0 0.0
    %228 = vmatprep.subr.mxu0 0.0
    %229 = vmatpush2.msra.mxu0 0.0
    %230 = vmatprep.mubr.f32.mxu0 0.0
    %231 = vmatmul.mubr.f32.gmra.mxu0 %v164
    %v232 = vpop.f32.mrf.mxu0
    %v233 = vadd.f32 0.0, %v232
    %v234 = vpop.f32.mrf.mxu0
    %235 = vdwg.mxu0
    %v236 = vand.u32 2147483647, %v233
    %vm237 = vcmp.le.f32.partialorder %v236, 0.7853982
    %vm238 = vcmp.lt.s32.totalorder %v233, 0
    %v239 = vand.u32 %v233, 2139095040
    %v240 = vshrl.u32 %v239, 23
    %v241 = vsub.s32 %v240, 127
    %v242 = vand.u32 2147483647, %v233
    %v243 = vand.u32 %v242, 8388607
    %v244 = vor.u32 %v243, 8388608
    %v245 = vsub.s32 0, %v244
    %v246 = vadd.s32 %v241, 1
    %vm247 = vcmp.gt.s32.totalorder %v246, 0
    %v248 = vsel %vm247, %v246, 0
    %v249 = vshrl.u32 %v248, 5
    %v250 = vand.u32 %v248, 31
    %v251 = vsub.s32 32, %v250
    %v252 = vshrl.u32 683565275, %v251
    %v253 = vshll.u32 683565275, %v250
    %v254 = vshrl.u32 2475754826, %v251
    %v255 = vor.u32 %v253, %v254
    %v256 = vshll.u32 2475754826, %v250
    %v257 = vshrl.u32 2131351028, %v251
    %v258 = vor.u32 %v256, %v257
    %v259 = vshll.u32 2131351028, %v250
    %v260 = vshrl.u32 2102212464, %v251
    %v261 = vor.u32 %v259, %v260
    %v262 = vshll.u32 2102212464, %v250
    %v263 = vshrl.u32 920167782, %v251
    %v264 = vor.u32 %v262, %v263
    %v265 = vshll.u32 920167782, %v250
    %v266 = vshrl.u32 1326507024, %v251
    %v267 = vor.u32 %v265, %v266
    %vm268 = vcmp.lt.s32.totalorder %v249, 1
    %vm269 = vcmp.lt.s32.totalorder %v249, 2
    %vm270 = vcmp.lt.s32.totalorder %v249, 3
    %vm271 = vcmp.lt.s32.totalorder %v249, 4
    %v272 = vsel %vm268, %v252, %v255
    %v273 = vsel %vm271, %v261, 2102212464
    %v274 = vsel %vm270, %v258, %v273
    %v275 = vsel %vm269, %v272, %v274
    %v276 = vsel %vm268, %v255, %v258
    %v277 = vsel %vm271, %v264, 920167782
    %v278 = vsel %vm270, %v261, %v277
    %v279 = vsel %vm269, %v276, %v278
    %v280 = vsel %vm268, %v258, %v261
    %v281 = vsel %vm271, %v267, 1326507024
    %v282 = vsel %vm270, %v264, %v281
    %v283 = vsel %vm269, %v280, %v282
    %v284 = vshll.u32 %v244, 8
    %v285 = vmul.u32.u64.compose %v284, %v283
    %v286 = vextract.low.u32 %v285
    %v287 = vextract.high.u32 %v285
    %v288 = vmul.u32.u64.compose %v284, %v279
    %v289 = vextract.low.u32 %v288
    %v290 = vextract.high.u32 %v288
    %v291 = vmul.u32 %v284, %v275
    %v292 = vadd.s32 %v287, %v289
    %vm293 = vc.u32 %v287, %v289
    %v294 = vadd.s32 %v290, 1
    %v295 = vsel %vm293, %v294, %v290
    %v296 = vadd.s32 %v291, %v295
    %v297 = vadd.s32 %v296, 536870912
    %v298 = vshrl.u32 %v297, 30
    %v299 = vshll.u32 %v298, 30
    %v300 = vsub.s32 %v296, %v299
    %vm301 = vcmp.lt.s32.totalorder %v300, 0
    %v302 = vsub.s32 0, %v300
    %v303 = vsel %vm301, %v302, %v300
    %v304 = vclz %v303
    %v305 = vsub.s32 %v304, 2
    %vm306 = vcmp.gt.s32.totalorder 0, %v305
    %v307 = vsel %vm306, 0, %v305
    %v308 = vsub.s32 32, %v307
    %v309 = vshll.u32 %v300, %v307
    %v310 = vshrl.u32 %v292, %v308
    %v311 = vor.u32 %v309, %v310
    %v312 = vsub.s32 4294967266, %v307
    %v313 = vadd.s32 %v312, 127
    %v314 = vshll.u32 %v313, 23
    %v315 = vor.u32 4788187, %v314
    %v316 = vand.u32 2147483647, %v315
    %v318 = vcvt.s32.f32 %v311
    %v319 = vmul.f32 %v318, %v316
    %v320 = vxor.u32 %v319, 2147483648
    %v321 = vsel %vm238, %v320, %v319
    %v322 = vsub.s32 4, %v298
    %v323 = vsel %vm238, %v322, %v298
    %v324 = vsel %vm237, %v233, %v321
    %v325 = vsel %vm237, 0, %v323
    %v326 = vcosq.f32.pop %v324
    %v327 = vsinq.f32.pop %v324
    %vm328 = vweird.f32 %v233
    %v329 = vand.u32 %v325, 3
    %vm330 = vcmp.lt.s32.totalorder %v329, 2
    %vm331 = vcmp.eq.s32.totalorder %v329, 0
    %v332 = vxor.u32 %v327, 2147483648
    %v333 = vsel %vm331, %v326, %v332
    %vm334 = vcmp.eq.s32.totalorder %v329, 2
    %v335 = vxor.u32 %v326, 2147483648
    %v336 = vsel %vm334, %v335, %v327
    %v337 = vsel %vm330, %v333, %v336
    %v338 = vsel %vm328, nan, %v337
    %v340 = vrot.slane %v338, 1
    %v343 = vmul.f32 %v154, %v338
    %v344 = vmul.f32 %v155, %v340
    %v345 = vand.u32 2147483647, %v233
    %vm346 = vcmp.le.f32.partialorder %v345, 0.7853982
    %vm347 = vcmp.lt.s32.totalorder %v233, 0
    %v348 = vand.u32 %v233, 2139095040
    %v349 = vshrl.u32 %v348, 23
    %v350 = vsub.s32 %v349, 127
    %v351 = vand.u32 2147483647, %v233
    %v352 = vand.u32 %v351, 8388607
    %v353 = vor.u32 %v352, 8388608
    %v354 = vsub.s32 0, %v353
    %v355 = vadd.s32 %v350, 1
    %vm356 = vcmp.gt.s32.totalorder %v355, 0
    %v357 = vsel %vm356, %v355, 0
    %v358 = vshrl.u32 %v357, 5
    %v359 = vand.u32 %v357, 31
    %v360 = vsub.s32 32, %v359
    %v361 = vshrl.u32 683565275, %v360
    %v362 = vshll.u32 683565275, %v359
    %v363 = vshrl.u32 2475754826, %v360
    %v364 = vor.u32 %v362, %v363
    %v365 = vshll.u32 2475754826, %v359
    %v366 = vshrl.u32 2131351028, %v360
    %v367 = vor.u32 %v365, %v366
    %v368 = vshll.u32 2131351028, %v359
    %v369 = vshrl.u32 2102212464, %v360
    %v370 = vor.u32 %v368, %v369
    %v371 = vshll.u32 2102212464, %v359
    %v372 = vshrl.u32 920167782, %v360
    %v373 = vor.u32 %v371, %v372
    %v374 = vshll.u32 920167782, %v359
    %v375 = vshrl.u32 1326507024, %v360
    %v376 = vor.u32 %v374, %v375
    %vm377 = vcmp.lt.s32.totalorder %v358, 1
    %vm378 = vcmp.lt.s32.totalorder %v358, 2
    %vm379 = vcmp.lt.s32.totalorder %v358, 3
    %vm380 = vcmp.lt.s32.totalorder %v358, 4
    %v381 = vsel %vm377, %v361, %v364
    %v382 = vsel %vm380, %v370, 2102212464
    %v383 = vsel %vm379, %v367, %v382
    %v384 = vsel %vm378, %v381, %v383
    %v385 = vsel %vm377, %v364, %v367
    %v386 = vsel %vm380, %v373, 920167782
    %v387 = vsel %vm379, %v370, %v386
    %v388 = vsel %vm378, %v385, %v387
    %v389 = vsel %vm377, %v367, %v370
    %v390 = vsel %vm380, %v376, 1326507024
    %v391 = vsel %vm379, %v373, %v390
    %v392 = vsel %vm378, %v389, %v391
    %v393 = vshll.u32 %v353, 8
    %v394 = vmul.u32.u64.compose %v393, %v392
    %v395 = vextract.low.u32 %v394
    %v396 = vextract.high.u32 %v394
    %v397 = vmul.u32.u64.compose %v393, %v388
    %v398 = vextract.low.u32 %v397
    %v399 = vextract.high.u32 %v397
    %v400 = vmul.u32 %v393, %v384
    %v401 = vadd.s32 %v396, %v398
    %vm402 = vc.u32 %v396, %v398
    %v403 = vadd.s32 %v399, 1
    %v404 = vsel %vm402, %v403, %v399
    %v405 = vadd.s32 %v400, %v404
    %v406 = vadd.s32 %v405, 536870912
    %v407 = vshrl.u32 %v406, 30
    %v408 = vshll.u32 %v407, 30
    %v409 = vsub.s32 %v405, %v408
    %vm410 = vcmp.lt.s32.totalorder %v409, 0
    %v411 = vsub.s32 0, %v409
    %v412 = vsel %vm410, %v411, %v409
    %v413 = vclz %v412
    %v414 = vsub.s32 %v413, 2
    %vm415 = vcmp.gt.s32.totalorder 0, %v414
    %v416 = vsel %vm415, 0, %v414
    %v417 = vsub.s32 32, %v416
    %v418 = vshll.u32 %v409, %v416
    %v419 = vshrl.u32 %v401, %v417
    %v420 = vor.u32 %v418, %v419
    %v421 = vsub.s32 4294967266, %v416
    %v422 = vadd.s32 %v421, 127
    %v423 = vshll.u32 %v422, 23
    %v424 = vor.u32 4788187, %v423
    %v425 = vand.u32 2147483647, %v424
    %v427 = vcvt.s32.f32 %v420
    %v428 = vmul.f32 %v427, %v425
    %v429 = vxor.u32 %v428, 2147483648
    %v430 = vsel %vm347, %v429, %v428
    %v431 = vsub.s32 4, %v407
    %v432 = vsel %vm347, %v431, %v407
    %v433 = vsel %vm346, %v233, %v430
    %v434 = vsel %vm346, 0, %v432
    %v435 = vcosq.f32.pop %v433
    %v436 = vsinq.f32.pop %v433
    %vm437 = vweird.f32 %v233
    %v438 = vadd.s32 %v434, 3
    %v439 = vand.u32 %v438, 3
    %vm440 = vcmp.lt.s32.totalorder %v439, 2
    %vm441 = vcmp.eq.s32.totalorder %v439, 0
    %v442 = vxor.u32 %v436, 2147483648
    %v443 = vsel %vm441, %v435, %v442
    %vm444 = vcmp.eq.s32.totalorder %v439, 2
    %v445 = vxor.u32 %v435, 2147483648
    %v446 = vsel %vm444, %v445, %v436
    %v447 = vsel %vm440, %v443, %v446
    %v448 = vsel %vm437, nan, %v447
    %v450 = vrot.slane %v448, 1
    %v453 = vmul.f32 %v154, %v448
    %v454 = vmul.f32 %v155, %v450
    %v455 = vmul.f32 %v40, %v343
    %v456 = vmul.f32 %v41, %v344
    %v457 = vmul.f32 %v42, %v453
    %v458 = vmul.f32 %v43, %v454
    %v459 = vsub.f32 %v455, %v457
    %v460 = vsub.f32 %v456, %v458
    %vm461 = vcmask 122880
    %462 = vst.msk [vmem:[#allocation7] sm:$0x1] %vm461, %v459
    %463 = vst.msk [vmem:[#allocation7 + $0x8] sm:$0x1] %vm461, %v460
    %v464 = vmul.f32 %v40, %v453
    %v465 = vmul.f32 %v41, %v454
    %v466 = vmul.f32 %v42, %v343
    %v467 = vmul.f32 %v43, %v344
    %v468 = vadd.f32 %v464, %v466
    %v469 = vadd.f32 %v465, %v467
    %470 = vst.msk [vmem:[#allocation7 + $0x1] sm:$0x1] %vm461, %v468
    %471 = vst.msk [vmem:[#allocation7 + $0x9] sm:$0x1] %vm461, %v469
    %v472 = vld [vmem:[#allocation2 + $0x2] sm:$0x1]
    %v473 = vld [vmem:[#allocation2 + $0xa] sm:$0x1]
    %v474 = vld [vmem:[#allocation2 + $0x3] sm:$0x1]
    %v475 = vld [vmem:[#allocation2 + $0xb] sm:$0x1]
    %v476 = vmul.f32 %v472, %v343
    %v477 = vmul.f32 %v473, %v344
    %v478 = vmul.f32 %v474, %v453
    %v479 = vmul.f32 %v475, %v454
    %v480 = vsub.f32 %v476, %v478
    %v481 = vsub.f32 %v477, %v479
    %482 = vst.msk [vmem:[#allocation7 + $0x2] sm:$0x1] %vm461, %v480
    %483 = vst.msk [vmem:[#allocation7 + $0xa] sm:$0x1] %vm461, %v481
    %v484 = vmul.f32 %v472, %v453
    %v485 = vmul.f32 %v473, %v454
    %v486 = vmul.f32 %v474, %v343
    %v487 = vmul.f32 %v475, %v344
    %v488 = vadd.f32 %v484, %v486
    %v489 = vadd.f32 %v485, %v487
    %490 = vst.msk [vmem:[#allocation7 + $0x3] sm:$0x1] %vm461, %v488
    %491 = vst.msk [vmem:[#allocation7 + $0xb] sm:$0x1] %vm461, %v489
    %v492 = vld [vmem:[#allocation2 + $0x4] sm:$0x1]
    %v493 = vld [vmem:[#allocation2 + $0xc] sm:$0x1]
    %v494 = vld [vmem:[#allocation2 + $0x5] sm:$0x1]
    %v495 = vld [vmem:[#allocation2 + $0xd] sm:$0x1]
    %v496 = vmul.f32 %v492, %v343
    %v497 = vmul.f32 %v493, %v344
    %v498 = vmul.f32 %v494, %v453
    %v499 = vmul.f32 %v495, %v454
    %v500 = vsub.f32 %v496, %v498
    %v501 = vsub.f32 %v497, %v499
    %502 = vst.msk [vmem:[#allocation7 + $0x4] sm:$0x1] %vm461, %v500
    %503 = vst.msk [vmem:[#allocation7 + $0xc] sm:$0x1] %vm461, %v501
    %v504 = vmul.f32 %v492, %v453
    %v505 = vmul.f32 %v493, %v454
    %v506 = vmul.f32 %v494, %v343
    %v507 = vmul.f32 %v495, %v344
    %v508 = vadd.f32 %v504, %v506
    %v509 = vadd.f32 %v505, %v507
    %510 = vst.msk [vmem:[#allocation7 + $0x5] sm:$0x1] %vm461, %v508
    %511 = vst.msk [vmem:[#allocation7 + $0xd] sm:$0x1] %vm461, %v509
    %v512 = vld [vmem:[#allocation2 + $0x6] sm:$0x1]
    %v513 = vld [vmem:[#allocation2 + $0xe] sm:$0x1]
    %v514 = vld [vmem:[#allocation2 + $0x7] sm:$0x1]
    %v515 = vld [vmem:[#allocation2 + $0xf] sm:$0x1]
    %v516 = vmul.f32 %v512, %v343
    %v517 = vmul.f32 %v513, %v344
    %v518 = vmul.f32 %v514, %v453
    %v519 = vmul.f32 %v515, %v454
    %v520 = vsub.f32 %v516, %v518
    %v521 = vsub.f32 %v517, %v519
    %522 = vst.msk [vmem:[#allocation7 + $0x6] sm:$0x1] %vm461, %v520
    %523 = vst.msk [vmem:[#allocation7 + $0xe] sm:$0x1] %vm461, %v521
    %v524 = vmul.f32 %v512, %v453
    %v525 = vmul.f32 %v513, %v454
    %v526 = vmul.f32 %v514, %v343
    %v527 = vmul.f32 %v515, %v344
    %v528 = vadd.f32 %v524, %v526
    %v529 = vadd.f32 %v525, %v527
    %530 = vst.msk [vmem:[#allocation7 + $0x7] sm:$0x1] %vm461, %v528
    %531 = vst.msk [vmem:[#allocation7 + $0xf] sm:$0x1] %vm461, %v529
    // Predicated region
    $region18: #{tpu_custom_call.1} parent=1 // pred_check
      _
    $region19: #{tpu_custom_call.1} parent=1 // pred_check_branch
      %533 = sbr.rel (0) target = $region21
    $region20: #{tpu_custom_call.1} parent=1 // pred_region
      %s535 = ssub.s32 256, 256
      %536 = vsyncadd [#allocation4], %s535
      %s537 = sshll.u32 [#allocation7], 4
      %s538 = int_to_ptr.vmem [resolvable:$true] %s537
      %543 = dma.vmem_to_hbm [thread:$0]  %s538, 256, %s2, [#allocation4], 128, 128, 8
    $region21: #{tpu_custom_call.1} parent=1 // pred_fallthru
      _
    // Predicated region
    $region22: #{tpu_custom_call.1} parent=1 // pred_check
      _
    $region23: #{tpu_custom_call.1} parent=1 // pred_check_branch
      %545 = sbr.rel (0) target = $region25
    $region24: #{tpu_custom_call.1} parent=1 // pred_region
      %546 = dma.done [#allocation4], 256
    $region25: #{tpu_custom_call.1} parent=1 // pred_fallthru
      _
    %547 = vsyncpa [#allocation3], 1
    %548 = vsyncpa [#allocation6], 1
    %549 = vsyncpa [#allocation4], 1

</llo_original>
